<compile_context>
chip_gen: v5e
topology: v5e:2x2
jax: 0.10.0
libtpu: 0.0.40
codegen_flags: <defaults>
</compile_context>

<pallas_src>
import jax
import jax.numpy as jnp
from jax.experimental import pallas as pl
from jax.experimental.pallas import tpu as pltpu


def _take_row_dma_kernel(idx_ref, x_hbm, o_hbm, sem):
    # idx_ref: (1,) int32 scalar-prefetch ref in SMEM -- the row to gather.
    # x_hbm:   (R, C) source, left in place in HBM (memory_space=pl.ANY).
    # o_hbm:   (1, C) destination, left in place in HBM (memory_space=pl.ANY).
    # sem:     single DMA-completion semaphore.
    r = idx_ref[0]
    cp = pltpu.make_async_copy(x_hbm.at[pl.ds(r, 1)], o_hbm, sem)
    cp.start()
    cp.wait()


def take_row(x, row_index, *, xla_bypass_bytes=0):
    """Pallas implementation of TakeRow.forward: x[row_index].view(1, -1).

    The whole op is a single direct HBM->HBM DMA of the selected row, which
    runs at the DMA engine's HBM copy rate on v5e/v6e/v7x and uses no VMEM.

    xla_bypass_bytes: if > 0 and the row payload is smaller than this many
    bytes, skip the pallas_call and use a fused XLA dynamic_slice instead
    (the custom-call boundary dominates for tiny rows).  Default 0 so the
    Pallas kernel path is always used.
    """
    R = x.shape[0]
    # Glue: flatten trailing dims so the kernel deals with a 2-D (R, C) slab.
    flat = x.reshape(R, -1)
    C = flat.shape[1]

    # Runtime row index (Python int or traced scalar).  Clamped because the
    # manual DMA has no runtime OOB check (diverges from PyTorch IndexError).
    idx_scalar = jnp.clip(jnp.asarray(row_index, dtype=jnp.int32), 0, R - 1)

    if xla_bypass_bytes > 0 and C * flat.dtype.itemsize < xla_bypass_bytes:
        # Small-row bypass: let XLA fuse a dynamic_slice; no custom call.
        return jax.lax.dynamic_slice_in_dim(flat, idx_scalar, 1, axis=0)

    idx = idx_scalar.reshape((1,))

    grid_spec = pltpu.PrefetchScalarGridSpec(
        num_scalar_prefetch=1,
        grid=(1,),
        in_specs=[pl.BlockSpec(memory_space=pl.ANY)],   # raw HBM ref, no auto-DMA
        out_specs=pl.BlockSpec(memory_space=pl.ANY),    # output stays in HBM
        scratch_shapes=[pltpu.SemaphoreType.DMA(())],
    )

    return pl.pallas_call(
        _take_row_dma_kernel,
        out_shape=jax.ShapeDtypeStruct((1, C), x.dtype),
        grid_spec=grid_spec,
        compiler_params=pltpu.CompilerParams(
            dimension_semantics=("arbitrary",),
        ),
    )(idx, flat)


if __name__ == "__main__":
    key = jax.random.PRNGKey(0)
    # Small NCHW-like input consistent with the forward: x[row_index] picks a
    # batch element, .view(1, -1) flattens it.
    x = jax.random.normal(key, (2, 4, 16, 16), dtype=jnp.float32)
    row_index = 1  # TakeRow(row_index=1)

    out = take_row(x, row_index)
    out = jax.block_until_ready(out)

    # Reference semantics check (pure JAX).
    ref = x[row_index].reshape(1, -1)
    assert out.shape == ref.shape == (1, 4 * 16 * 16)
    assert out.dtype == ref.dtype
    assert jnp.array_equal(out, ref)

    # Ragged C (not a multiple of 128): the direct-DMA path has no (8,128)
    # BlockSpec constraint, so no padding or masked stores are needed.
    x2 = jax.random.normal(jax.random.PRNGKey(0), (3, 5, 7, 9), dtype=jnp.float32)
    out2 = jax.block_until_ready(take_row(x2, 2))
    ref2 = x2[2].reshape(1, -1)
    assert out2.shape == ref2.shape == (1, 5 * 7 * 9)
    assert jnp.array_equal(out2, ref2)

    print("KERNEL_OK")
</pallas_src>

<mosaic_0001>
module attributes {stable_mosaic.version = 11 : i64} {
  func.func @_take_row_dma_kernel(%arg0: i32, %arg1: memref<1xi32, #tpu.memory_space<smem>>, %arg2: memref<2x1024xf32, #tpu.memory_space<any>>, %arg3: memref<1x1024xf32, #tpu.memory_space<any>>, %arg4: memref<!tpu.dma_semaphore, #tpu.memory_space<semaphore_mem>>) attributes {dimension_semantics = [#tpu.dimension_semantics<arbitrary>], iteration_bounds = array<i64: 1>, scalar_prefetch = 1 : i64, scratch_operands = 1 : i64, tpu.core_type = #tpu.core_type<tc>, window_params = [{}, {}]} {
    %c0 = arith.constant 0 : index
    %0 = memref.load %arg1[%c0] : memref<1xi32, #tpu.memory_space<smem>>
    %c0_i32 = arith.constant 0 : i32
    %1 = tpu.memref_slice %arg2[%0, %c0_i32] : memref<2x1024xf32, #tpu.memory_space<any>> -> memref<1x1024xf32, #tpu.memory_space<any>>
    tpu.enqueue_dma source(%1 : memref<1x1024xf32, #tpu.memory_space<any>>) target(%arg3 : memref<1x1024xf32, #tpu.memory_space<any>>) target_semaphore(%arg4 : memref<!tpu.dma_semaphore, #tpu.memory_space<semaphore_mem>>)
    %c0_i32_0 = arith.constant 0 : i32
    %2 = tpu.memref_slice %arg2[%0, %c0_i32_0] : memref<2x1024xf32, #tpu.memory_space<any>> -> memref<1x1024xf32, #tpu.memory_space<any>>
    tpu.wait_dma2 semaphore(%arg4 : memref<!tpu.dma_semaphore, #tpu.memory_space<semaphore_mem>>) src(%2 : memref<1x1024xf32, #tpu.memory_space<any>>) dst(%arg3 : memref<1x1024xf32, #tpu.memory_space<any>>)
    return
  }
}

</mosaic_0001>

<llo_original>
// kernel: tpu_custom_call.1
$region0: #{tpu_custom_call.1}
  #allocation0 [shape = 'u32[]', space=smem, size = 0x4, offset = 0x4, fixed_abs, tag = 'smem constant byte address 0x4 - core index']
  #allocation1 [shape = 'u32[72,128]{1,0:T(1,128)}', space=vmem, size = 0x9000, scoped, tag = 'internal scratch']
  #allocation2 [shape = 's32[1]{0}', space=sflag, size = 0x4, scoped, tag = 'scratch operand']
  #allocation3 [shape = 's32[1]{0}', space=sflag, size = 0x4, scoped, tag = 'scoped memory for tpu_custom_call.1']
  #allocation4 [shape = 's32[1]{0:T(128)S(6)}', space=smem, size = 0x200, scoped, tag = 'prefetched SMEM operand 0']
  #allocation5 [shape = 's32[]', space=sflag, size = 0x4, offset = 0, fixed_abs, tag = 'sflag constant byte address 0x0 - dummy sync flag']
  %s0 = inlined_call_operand.<no memory space> [shape: s32[1], index: 0, kind: input, shape index: {}]
  %s1 = inlined_call_operand.hbm [shape: f32[2,1024], index: 1, kind: input, shape index: {}]
  %s2 = inlined_call_operand.hbm [shape: f32[1,1024], index: 2, kind: output, shape index: {}]
  %s3 = sld [smem:[#allocation0]]
  $region2: #{tpu_custom_call.1} parent=0
    _
  %s5 = ssub.s32 1, %s3
  %s6 = scalar_select 0, %s5, %s3
  %7 = sst [smem:[#allocation4]] %s0
  $region1: #{tpu_custom_call.1} parent=0
    #allocation6 [shape = 'u32[3]{0}', space=smem, size = 0xc, scoped, tag = 'DMA stride descriptor']
    %s8 = sld [smem:[#allocation4]]
    %s9 = sshrl.u32 %s8, 1
    %s10 = sand.u32 %s8, 1
    %s11 = smul.u32 %s9, 16
    %s12 = sadd.s32 %s10, %s11
    %s13 = scalar_lea.hbm %s1, %s12
    %s15 = sshll.u32 1, 14
    %s16 = sxor.u32 4294967295, %s15
    %s18 = sshll.u32 %s13, 4
    %s19 = int_to_ptr.hbm [resolvable:$true] %s18
    %s20 = sshll.u32 %s2, 4
    %s21 = int_to_ptr.hbm [resolvable:$true] %s20
    %25 = sst [smem:[#allocation6]] 32
    %s26 = scalar_lea.smem [#allocation6], 1
    %27 = sst [smem:[%s26]] 16
    %s28 = scalar_lea.smem [#allocation6], 2
    %29 = sst [smem:[%s28]] 1
    %31 = dma.general %s19, 128, %s21, [#allocation2], [#allocation5], [#allocation6], 0, 0
    %s32 = smul.u32 1, 8
    %s33 = sshll.u32 %s32, 4
    %34 = dma.done [#allocation2], %s33
  %35 = vsyncmov [#allocation2]
  %s36 = vpop.sfrf %35
  %p37 = scmp.eq.s32.totalorder %s36, 0
  %p38 = pneg %p37
  %40 = shalt.err (%p38)

</llo_original>
